<compile_context>
chip_gen: v7x
topology: tpu7x:2x2x1
jax: 0.10.0
libtpu: 0.0.40
codegen_flags: <defaults>
</compile_context>

<pallas_src>
import functools

import jax
import jax.numpy as jnp
from jax.experimental import pallas as pl
from jax.experimental.pallas import tpu as pltpu


# ----------------------------------------------------------------------------
# helpers
# ----------------------------------------------------------------------------

def _pick_tile(dim, prefs):
    """Largest preferred tile that evenly divides dim, else the full dim.
    TODO(synk): cap the full-dim fallback with cdiv grids + masked remainder
    tiles for very large non-divisible dims (VMEM guard for v7x's 64 MiB)."""
    for t in prefs:
        if dim >= t and dim % t == 0:
            return t
    return dim


def _elu(y):
    return jnp.where(y > 0, y, jnp.expm1(y))


# ----------------------------------------------------------------------------
# Gridded, accumulator-based linear kernel (x @ w + b), bf16 MXU / f32 acc
# ----------------------------------------------------------------------------

def _matmul_kernel(x_ref, w_ref, b_ref, o_ref, acc_ref, *, activation):
    k = pl.program_id(2)

    @pl.when(k == 0)
    def _():
        acc_ref[...] = jnp.zeros_like(acc_ref)

    acc_ref[...] += jnp.dot(x_ref[...].astype(jnp.bfloat16), w_ref[...],
                            preferred_element_type=jnp.float32)

    @pl.when(k == pl.num_programs(2) - 1)
    def _():
        y = acc_ref[...] + b_ref[...]
        if activation == "elu":
            y = _elu(y)
        o_ref[...] = y.astype(o_ref.dtype)


def pallas_linear(x, w, b, activation=None, out_dtype=jnp.float32):
    """y = x @ w + b.  x: (M, K) f32 (cast to bf16 in-kernel), w: (K, N)
    (cast to bf16 once outside), b: (N,).  f32 accumulation."""
    M, K = x.shape
    N = w.shape[1]
    w = w if w.dtype == jnp.bfloat16 else w.astype(jnp.bfloat16)
    tm = _pick_tile(M, (512, 256, 128, 64, 32, 16, 8))
    tn = _pick_tile(N, (256, 128))
    tk = _pick_tile(K, (512, 256, 128))
    grid = (M // tm, N // tn, K // tk)
    return pl.pallas_call(
        functools.partial(_matmul_kernel, activation=activation),
        out_shape=jax.ShapeDtypeStruct((M, N), out_dtype),
        grid=grid,
        in_specs=[
            pl.BlockSpec((tm, tk), lambda i, j, k: (i, k)),
            pl.BlockSpec((tk, tn), lambda i, j, k: (k, j)),
            pl.BlockSpec((1, tn), lambda i, j, k: (0, j)),
        ],
        out_specs=pl.BlockSpec((tm, tn), lambda i, j, k: (i, j)),
        scratch_shapes=[pltpu.VMEM((tm, tn), jnp.float32)],
        compiler_params=pltpu.CompilerParams(
            dimension_semantics=("parallel", "parallel", "arbitrary")),
    )(x, w, b.reshape(1, N).astype(jnp.float32))


# ----------------------------------------------------------------------------
# Bidirectional LSTM recurrence: grid = (batch-block, time-block of TT steps),
# state in VMEM scratch, backward direction handled via reversed BlockSpecs.
# ----------------------------------------------------------------------------

def _bilstm_rec_kernel(gf_ref, gb_ref, len_ref, whh_ref, of_ref, ob_ref,
                       hf, cf, hb, cb, *, hidden, steps):
    H, TT = hidden, steps
    g = pl.program_id(1)
    total_t = pl.num_programs(1) * TT

    @pl.when(g == 0)
    def _():
        hf[...] = jnp.zeros_like(hf)
        cf[...] = jnp.zeros_like(cf)
        hb[...] = jnp.zeros_like(hb)
        cb[...] = jnp.zeros_like(cb)

    lens = len_ref[...]            # (bb, 1) int32
    whh = whh_ref[...]             # (2H, 8H) bf16, block-diagonal fwd/bwd

    def cell(gates, c):
        i = jax.nn.sigmoid(gates[:, :H])
        f = jax.nn.sigmoid(gates[:, H:2 * H])
        gg = jnp.tanh(gates[:, 2 * H:3 * H])
        o = jax.nn.sigmoid(gates[:, 3 * H:])
        c_new = f * c + i * gg
        return o * jnp.tanh(c_new), c_new

    def step(i, carry):
        s = g * TT + i                                   # global processing step
        gf = gf_ref[i].astype(jnp.float32)               # (bb, 4H) fwd gates @ t=s
        gb = gb_ref[TT - 1 - i].astype(jnp.float32)      # bwd gates @ t=T-1-s
        h_cat = jnp.concatenate([hf[...], hb[...]], axis=-1)        # (bb, 2H)
        hh = jnp.dot(h_cat.astype(jnp.bfloat16), whh,
                     preferred_element_type=jnp.float32)             # (bb, 8H)
        hfn, cfn = cell(gf + hh[:, :4 * H], cf[...])
        hbn, cbn = cell(gb + hh[:, 4 * H:], cb[...])
        v_f = s < lens                                   # fwd: position s valid
        v_b = s >= (total_t - lens)                      # bwd: position T-1-s valid
        hf[...] = jnp.where(v_f, hfn, hf[...])
        cf[...] = jnp.where(v_f, cfn, cf[...])
        hb[...] = jnp.where(v_b, hbn, hb[...])
        cb[...] = jnp.where(v_b, cbn, cb[...])
        # padded positions emit zeros (pack/pad_packed semantics)
        of_ref[i] = jnp.where(v_f, hfn, 0.0)
        ob_ref[TT - 1 - i] = jnp.where(v_b, hbn, 0.0)    # position-ordered write
        return carry

    jax.lax.fori_loop(0, TT, step, 0, unroll=True)


def _bilstm_recurrence(gx, lens2d, w_hh, hidden):
    """gx: (T, B2, 8H) bf16 gate inputs (cols [0,4H) fwd, [4H,8H) bwd).
    Returns (out_f, out_b), each (T, B2, H) f32, position-ordered, zero-padded."""
    T, B2, _ = gx.shape
    H = hidden
    TT = _pick_tile(T, (16, 8))
    Tb = T // TT
    nb = 2 if B2 % 16 == 0 else 1        # v7x: split batch across 2 TensorCores
    bb = B2 // nb

    return pl.pallas_call(
        functools.partial(_bilstm_rec_kernel, hidden=H, steps=TT),
        out_shape=(jax.ShapeDtypeStruct((T, B2, H), jnp.float32),
                   jax.ShapeDtypeStruct((T, B2, H), jnp.float32)),
        grid=(nb, Tb),
        in_specs=[
            # same projection tensor read twice: fwd columns in time order,
            # bwd columns with time blocks reversed (rows reversed in-kernel)
            pl.BlockSpec((TT, bb, 4 * H), lambda n, g: (g, n, 0)),
            pl.BlockSpec((TT, bb, 4 * H), lambda n, g: (Tb - 1 - g, n, 1)),
            pl.BlockSpec((bb, 1), lambda n, g: (n, 0)),
            pl.BlockSpec((2 * H, 8 * H), lambda n, g: (0, 0)),
        ],
        out_specs=(pl.BlockSpec((TT, bb, H), lambda n, g: (g, n, 0)),
                   pl.BlockSpec((TT, bb, H), lambda n, g: (Tb - 1 - g, n, 0))),
        scratch_shapes=[pltpu.VMEM((bb, H), jnp.float32)] * 4,
        compiler_params=pltpu.CompilerParams(
            dimension_semantics=("parallel", "arbitrary")),
    )(gx, gx, lens2d, w_hh)


def bilstm_pair_tm(x_tm, lens, p, hidden):
    """Bidirectional LSTM (pack_padded semantics) on a stacked, time-major
    batch.  x_tm: (T, B2, Din).  Returns (out_f, out_b) each (T, B2, H)."""
    T, B2, Din = x_tm.shape
    H = hidden
    # one fused input projection for both directions and both sentences,
    # gate stream stored in bf16
    proj = pallas_linear(x_tm.reshape(T * B2, Din), p["w_ih"], p["b_gates"],
                         out_dtype=jnp.bfloat16)
    proj = proj.reshape(T, B2, 8 * H)
    lens2d = lens.reshape(B2, 1).astype(jnp.int32)
    return _bilstm_recurrence(proj, lens2d, p["w_hh"], H)


# ----------------------------------------------------------------------------
# Soft attention align + combine, fused.  grid = (side, batch-block); side 0
# produces q1_combined rows, side 1 produces q2_combined rows.
# ----------------------------------------------------------------------------

def _attn_combine_kernel(xf_ref, xb_ref, yf_ref, yb_ref, my_ref, o_ref):
    x = jnp.concatenate([xf_ref[...], xb_ref[...]], axis=-1)      # (tb, T, 2H)
    y = jnp.concatenate([yf_ref[...], yb_ref[...]], axis=-1)      # (tb, T, 2H)
    m = my_ref[...]                                               # (tb, 1, T)
    x16 = x.astype(jnp.bfloat16)
    y16 = y.astype(jnp.bfloat16)

    s = jnp.einsum('bqd,bkd->bqk', x16, y16,
                   preferred_element_type=jnp.float32) + m        # (tb, T, T)
    s = s - jnp.max(s, axis=-1, keepdims=True)
    e = jnp.exp(s)
    w = e * pl.reciprocal(jnp.sum(e, axis=-1, keepdims=True), approx=True)
    al = jnp.einsum('bqk,bkd->bqd', w.astype(jnp.bfloat16), y16,
                    preferred_element_type=jnp.float32)           # (tb, T, 2H)

    # [x, x_align, x - x_align, x * x_align]  (cat + submul, fused)
    o_ref[...] = jnp.concatenate([x, al, x - al, x * al], axis=-1)


def pallas_attention_combine(h_f, h_b, madd, B):
    """h_f, h_b: (2B, T, H) batch-major encoder halves (rows [0,B)=sent1,
    [B,2B)=sent2).  madd: (2B, 1, T) additive key masks.  Returns the stacked
    combined tensor (2B, T, 8H)."""
    B2, T, H = h_f.shape
    tb = _pick_tile(B, (8, 4, 2, 1))
    Bb = B // tb
    return pl.pallas_call(
        _attn_combine_kernel,
        out_shape=jax.ShapeDtypeStruct((B2, T, 8 * H), jnp.float32),
        grid=(2, Bb),
        in_specs=[
            pl.BlockSpec((tb, T, H), lambda s, b: (s * Bb + b, 0, 0)),        # x fwd
            pl.BlockSpec((tb, T, H), lambda s, b: (s * Bb + b, 0, 0)),        # x bwd
            pl.BlockSpec((tb, T, H), lambda s, b: ((1 - s) * Bb + b, 0, 0)),  # y fwd
            pl.BlockSpec((tb, T, H), lambda s, b: ((1 - s) * Bb + b, 0, 0)),  # y bwd
            pl.BlockSpec((tb, 1, T), lambda s, b: ((1 - s) * Bb + b, 0, 0)),  # mask(y)
        ],
        out_specs=pl.BlockSpec((tb, T, 8 * H), lambda s, b: (s * Bb + b, 0, 0)),
        compiler_params=pltpu.CompilerParams(
            dimension_semantics=("parallel", "parallel")),
    )(h_f, h_b, h_f, h_b, madd)


# ----------------------------------------------------------------------------
# Pooling: [avg_f, avg_b, max_f, max_b] over time (matches avg/max_pool1d over
# the full padded T); consumes the time-major recurrence outputs directly.
# ----------------------------------------------------------------------------

def _pool_kernel(f_ref, b_ref, o_ref):
    xf = f_ref[...]                                   # (T, tb, H)
    xb = b_ref[...]
    o_ref[...] = jnp.concatenate(
        [jnp.mean(xf, axis=0), jnp.mean(xb, axis=0),
         jnp.max(xf, axis=0), jnp.max(xb, axis=0)], axis=-1)


def pallas_pool(out_f, out_b):
    T, B2, H = out_f.shape
    tb = _pick_tile(B2, (256, 128, 64, 32, 16, 8))
    return pl.pallas_call(
        _pool_kernel,
        out_shape=jax.ShapeDtypeStruct((B2, 4 * H), jnp.float32),
        grid=(B2 // tb,),
        in_specs=[pl.BlockSpec((T, tb, H), lambda b: (0, b, 0)),
                  pl.BlockSpec((T, tb, H), lambda b: (0, b, 0))],
        out_specs=pl.BlockSpec((tb, 4 * H), lambda b: (b, 0)),
        compiler_params=pltpu.CompilerParams(dimension_semantics=("parallel",)),
    )(out_f, out_b)


# ----------------------------------------------------------------------------
# Fused FC head: BN -> Linear -> ELU -> BN -> Linear -> ELU -> BN -> Linear(1)
# (single kernel, intermediates stay in vregs, lane-dense padded output)
# ----------------------------------------------------------------------------

def _fc_head_kernel(x_ref, s0_ref, t0_ref, w1_ref, b1_ref, s1_ref, t1_ref,
                    w2_ref, b2_ref, s2_ref, t2_ref, w3_ref, b3_ref, o_ref):
    h = x_ref[...] * s0_ref[...] + t0_ref[...]
    h = _elu(jnp.dot(h, w1_ref[...], preferred_element_type=jnp.float32)
             + b1_ref[...])
    h = h * s1_ref[...] + t1_ref[...]
    h = _elu(jnp.dot(h, w2_ref[...], preferred_element_type=jnp.float32)
             + b2_ref[...])
    h = h * s2_ref[...] + t2_ref[...]
    o_ref[...] = jnp.dot(h, w3_ref[...], preferred_element_type=jnp.float32) \
        + b3_ref[...]


def pallas_fc_head(feat, params, eps=1e-5):
    B, F = feat.shape
    L = params["w1"].shape[1]
    NPAD = 128   # lane-dense output; real column 0 is the similarity score

    inv_std = 1.0 / jnp.sqrt(1.0 + eps)
    s0 = (params["bn0_gamma"] * inv_std).reshape(1, F).astype(jnp.float32)
    t0 = params["bn0_beta"].reshape(1, F).astype(jnp.float32)
    s1 = (params["bn1_gamma"] * inv_std).reshape(1, L).astype(jnp.float32)
    t1 = params["bn1_beta"].reshape(1, L).astype(jnp.float32)
    s2 = (params["bn2_gamma"] * inv_std).reshape(1, L).astype(jnp.float32)
    t2 = params["bn2_beta"].reshape(1, L).astype(jnp.float32)
    w3p = jnp.zeros((L, NPAD), jnp.float32).at[:, :1].set(params["w3"])
    b3p = jnp.zeros((1, NPAD), jnp.float32).at[:, :1].set(
        params["b3"].reshape(1, 1))

    consts = (s0, t0, params["w1"], params["b1"].reshape(1, L), s1, t1,
              params["w2"], params["b2"].reshape(1, L), s2, t2, w3p, b3p)

    tb = _pick_tile(B, (256, 128, 8))
    in_specs = ([pl.BlockSpec((tb, F), lambda i: (i, 0))]
                + [pl.BlockSpec(c.shape, lambda i: (0, 0)) for c in consts])

    out = pl.pallas_call(
        _fc_head_kernel,
        out_shape=jax.ShapeDtypeStruct((B, NPAD), jnp.float32),
        grid=(B // tb,),
        in_specs=in_specs,
        out_specs=pl.BlockSpec((tb, NPAD), lambda i: (i, 0)),
        compiler_params=pltpu.CompilerParams(dimension_semantics=("parallel",)),
    )(feat, *consts)
    return out[:, :1]


# ----------------------------------------------------------------------------
# Parameters (deterministic synthetic init; no word2vec file is loaded)
# ----------------------------------------------------------------------------

def init_params(key, vocab, emb, hidden, linear):
    keys = iter(jax.random.split(key, 40))
    H = hidden

    def nrm(shape, scale=0.1):
        return (scale * jax.random.normal(next(keys), shape)).astype(jnp.float32)

    def lstm_params(in_dim):
        w_ih_f = nrm((4 * H, in_dim))
        w_ih_b = nrm((4 * H, in_dim))
        w_hh_f = nrm((4 * H, H))
        w_hh_b = nrm((4 * H, H))
        b_ih_f, b_hh_f = nrm((4 * H,)), nrm((4 * H,))
        b_ih_b, b_hh_b = nrm((4 * H,)), nrm((4 * H,))
        # pre-transposed, fwd/bwd-concatenated input projection (cols 0:4H fwd)
        w_ih = jnp.concatenate([w_ih_f.T, w_ih_b.T], axis=1)         # (Din, 8H)
        b_gates = jnp.concatenate([b_ih_f + b_hh_f, b_ih_b + b_hh_b])
        # block-diagonal combined hidden->gate matrix (one MXU matmul per step)
        w_hh = jnp.zeros((2 * H, 8 * H), jnp.float32)
        w_hh = w_hh.at[:H, :4 * H].set(w_hh_f.T)
        w_hh = w_hh.at[H:, 4 * H:].set(w_hh_b.T)
        return {"w_ih": w_ih, "b_gates": b_gates,
                "w_hh": w_hh.astype(jnp.bfloat16)}

    p = {
        "emb": nrm((vocab, emb)),                         # synthetic "word2vec"
        "bn_emb_gamma": 1.0 + nrm((emb,), 0.01), "bn_emb_beta": nrm((emb,), 0.01),
        "lstm1": lstm_params(emb),
        "lstm2": lstm_params(H * 8),
        "bn0_gamma": 1.0 + nrm((H * 8,), 0.01), "bn0_beta": nrm((H * 8,), 0.01),
        "w1": nrm((H * 8, linear)), "b1": nrm((linear,)),
        "bn1_gamma": 1.0 + nrm((linear,), 0.01), "bn1_beta": nrm((linear,), 0.01),
        "w2": nrm((linear, linear)), "b2": nrm((linear,)),
        "bn2_gamma": 1.0 + nrm((linear,), 0.01), "bn2_beta": nrm((linear,), 0.01),
        "w3": nrm((linear, 1)), "b3": nrm((1,)),
    }
    return p


# ----------------------------------------------------------------------------
# ESIM forward
# ----------------------------------------------------------------------------

def esim_forward(params, sent1, sent2, lens1, lens2, hidden):
    B, T = sent1.shape
    H = hidden

    tok_pair = jnp.concatenate([sent1, sent2], axis=0)          # (2B, T)
    lens_pair = jnp.concatenate([lens1, lens2], axis=0)         # (2B,)

    # embeddings + bn_embeds (eval mode affine), gathered directly time-major
    emb_scale = params["bn_emb_gamma"] / jnp.sqrt(1.0 + 1e-5)
    x_tm = params["emb"][tok_pair.T] * emb_scale + params["bn_emb_beta"]  # (T,2B,E)

    # encoder BiLSTM (shared lstm1), both sentences in one stacked batch
    o1f_tm, o1b_tm = bilstm_pair_tm(x_tm, lens_pair, params["lstm1"], H)  # (T,2B,H)

    # attention + combine (fused Pallas kernel); needs batch-major halves
    o_f = jnp.transpose(o1f_tm, (1, 0, 2))                       # (2B, T, H)
    o_b = jnp.transpose(o1b_tm, (1, 0, 2))
    NEG = -1e30                                                  # finite mask
    madd = jnp.where(tok_pair == 0, NEG, 0.0).astype(jnp.float32)[:, None, :]
    comb = pallas_attention_combine(o_f, o_b, madd, B)           # (2B, T, 8H)

    # composition BiLSTM (shared lstm2)
    q_tm = jnp.transpose(comb, (1, 0, 2))                        # (T, 2B, 8H)
    c_f, c_b = bilstm_pair_tm(q_tm, lens_pair, params["lstm2"], H)

    # pooling (Pallas kernel): [avg, max] over full padded T (matches PyTorch)
    rep = pallas_pool(c_f, c_b)                                  # (2B, 4H)
    feat = jnp.concatenate([rep[:B], rep[B:]], axis=-1)          # (B, 8H)

    # fused FC head (single Pallas kernel, lane-dense padded output)
    return pallas_fc_head(feat, params)                          # (B, 1)


# ----------------------------------------------------------------------------

if __name__ == "__main__":
    B, T = 2, 8
    VOCAB, EMB, HIDDEN, LINEAR = 50, 32, 32, 32

    key = jax.random.PRNGKey(0)
    kp, ks1, ks2 = jax.random.split(key, 3)
    params = init_params(kp, VOCAB, EMB, HIDDEN, LINEAR)

    lens1 = jnp.array([8, 5], jnp.int32)
    lens2 = jnp.array([6, 8], jnp.int32)
    t = jnp.arange(T)[None, :]
    tok1 = jax.random.randint(ks1, (B, T), 1, VOCAB)
    tok2 = jax.random.randint(ks2, (B, T), 1, VOCAB)
    sent1 = jnp.where(t < lens1[:, None], tok1, 0).astype(jnp.int32)
    sent2 = jnp.where(t < lens2[:, None], tok2, 0).astype(jnp.int32)

    out = esim_forward(params, sent1, sent2, lens1, lens2, HIDDEN)
    out = jax.block_until_ready(out)
    assert out.shape == (B, 1), out.shape
    assert bool(jnp.all(jnp.isfinite(out)))
    print("KERNEL_OK")
</pallas_src>

<mosaic_0001>
module attributes {stable_mosaic.version = 11 : i64} {
  func.func @_matmul_kernel(%arg0: i32, %arg1: i32, %arg2: i32, %arg3: memref<32x32xf32, #tpu.memory_space<vmem>>, %arg4: memref<32x256xbf16, #tpu.memory_space<vmem>>, %arg5: memref<1x256xf32, #tpu.memory_space<vmem>>, %arg6: memref<32x256xbf16, #tpu.memory_space<vmem>>, %arg7: memref<32x256xf32, #tpu.memory_space<vmem>>) attributes {dimension_semantics = [#tpu.dimension_semantics<parallel>, #tpu.dimension_semantics<parallel>, #tpu.dimension_semantics<arbitrary>], iteration_bounds = array<i64: 1, 1, 1>, scalar_prefetch = 0 : i64, scratch_operands = 1 : i64, tpu.core_type = #tpu.core_type<tc>, window_params = [{transform_indices = @transform_0, window_bounds = array<i64: 32, 32>}, {transform_indices = @transform_1, window_bounds = array<i64: 32, 256>}, {transform_indices = @transform_2, window_bounds = array<i64: 1, 256>}, {transform_indices = @transform_3, window_bounds = array<i64: 32, 256>}]} {
    %c0_i32 = arith.constant 0 : i32
    %0 = arith.cmpi eq, %arg2, %c0_i32 : i32
    %1 = arith.extui %0 : i1 to i32
    %c0_i32_0 = arith.constant 0 : i32
    %2 = arith.cmpi ne, %1, %c0_i32_0 : i32
    scf.if %2 {
      %cst_10 = arith.constant 0.000000e+00 : f32
      %13 = vector.broadcast %cst_10 : f32 to vector<32x256xf32>
      %c0_11 = arith.constant 0 : index
      %c0_12 = arith.constant 0 : index
      %14 = vector.load %arg7[%c0_11, %c0_12] : memref<32x256xf32, #tpu.memory_space<vmem>>, vector<32x256xf32>
      tpu.vector_store %arg7[%c0_11, %c0_12], %13 {strides = array<i32>} : memref<32x256xf32, #tpu.memory_space<vmem>>, vector<32x256xf32>,
    } else {
    }
    %c0 = arith.constant 0 : index
    %c0_1 = arith.constant 0 : index
    %3 = vector.load %arg7[%c0, %c0_1] : memref<32x256xf32, #tpu.memory_space<vmem>>, vector<32x256xf32>
    %c0_2 = arith.constant 0 : index
    %c0_3 = arith.constant 0 : index
    %4 = vector.load %arg3[%c0_2, %c0_3] : memref<32x32xf32, #tpu.memory_space<vmem>>, vector<32x32xf32>
    %5 = arith.truncf %4 : vector<32x32xf32> to vector<32x32xbf16>
    %c0_4 = arith.constant 0 : index
    %c0_5 = arith.constant 0 : index
    %6 = vector.load %arg4[%c0_4, %c0_5] : memref<32x256xbf16, #tpu.memory_space<vmem>>, vector<32x256xbf16>
    %cst = arith.constant dense<0.000000e+00> : vector<32x256xf32>
    %7 = tpu.matmul %5, %6, %cst {dimension_numbers = #tpu.dot_dimension_numbers<[1], [0], [0], [1], [0, 0, 1, 1], [], []>} : vector<32x32xbf16>, vector<32x256xbf16>, vector<32x256xf32> -> vector<32x256xf32>
    %8 = arith.addf %3, %7 : vector<32x256xf32>
    %c0_6 = arith.constant 0 : index
    %c0_7 = arith.constant 0 : index
    %9 = vector.load %arg7[%c0_6, %c0_7] : memref<32x256xf32, #tpu.memory_space<vmem>>, vector<32x256xf32>
    tpu.vector_store %arg7[%c0_6, %c0_7], %8 {strides = array<i32>} : memref<32x256xf32, #tpu.memory_space<vmem>>, vector<32x256xf32>,
    %c0_i32_8 = arith.constant 0 : i32
    %10 = arith.cmpi eq, %arg2, %c0_i32_8 : i32
    %11 = arith.extui %10 : i1 to i32
    %c0_i32_9 = arith.constant 0 : i32
    %12 = arith.cmpi ne, %11, %c0_i32_9 : i32
    scf.if %12 {
      %c0_10 = arith.constant 0 : index
      %c0_11 = arith.constant 0 : index
      %13 = vector.load %arg7[%c0_10, %c0_11] : memref<32x256xf32, #tpu.memory_space<vmem>>, vector<32x256xf32>
      %c0_12 = arith.constant 0 : index
      %c0_13 = arith.constant 0 : index
      %14 = vector.load %arg5[%c0_12, %c0_13] : memref<1x256xf32, #tpu.memory_space<vmem>>, vector<1x256xf32>
      %15 = vector.broadcast %14 : vector<1x256xf32> to vector<32x256xf32>
      %16 = arith.addf %13, %15 : vector<32x256xf32>
      %17 = arith.truncf %16 : vector<32x256xf32> to vector<32x256xbf16>
      %c0_14 = arith.constant 0 : index
      %c0_15 = arith.constant 0 : index
      %18 = vector.load %arg6[%c0_14, %c0_15] : memref<32x256xbf16, #tpu.memory_space<vmem>>, vector<32x256xbf16>
      tpu.vector_store %arg6[%c0_14, %c0_15], %17 {strides = array<i32>} : memref<32x256xbf16, #tpu.memory_space<vmem>>, vector<32x256xbf16>,
    } else {
    }
    return
  }
  func.func @transform_0(%arg0: i32, %arg1: i32, %arg2: i32) -> (i32, i32) {
    %c0_i32 = arith.constant 0 : i32
    return %arg0, %arg2 : i32, i32
  }
  func.func @transform_1(%arg0: i32, %arg1: i32, %arg2: i32) -> (i32, i32) {
    %c0_i32 = arith.constant 0 : i32
    return %arg2, %arg1 : i32, i32
  }
  func.func @transform_2(%arg0: i32, %arg1: i32, %arg2: i32) -> (i32, i32) {
    %c0_i32 = arith.constant 0 : i32
    %c0_i32_0 = arith.constant 0 : i32
    return %c0_i32, %arg1 : i32, i32
  }
  func.func @transform_3(%arg0: i32, %arg1: i32, %arg2: i32) -> (i32, i32) {
    %c0_i32 = arith.constant 0 : i32
    return %arg0, %arg1 : i32, i32
  }
}

</mosaic_0001>

<llo_original>
// kernel: tpu_custom_call.1
$region0: #{tpu_custom_call.1}
  #allocation0 [shape = 'u32[]', space=smem, size = 0x4, offset = 0x4, fixed_abs, tag = 'smem constant byte address 0x4 - core index']
  #allocation1 [shape = 'u32[144,128]{1,0:T(1,128)}', space=vmem, size = 0x12000, scoped, tag = 'internal scratch']
  #allocation2 [shape = 'f32[32,256]{1,0:T(8,128)}', space=vmem, size = 0x8000, scoped, tag = 'scratch operand']
  %s0 = inlined_call_operand.hbm [shape: f32[32,32], index: 0, kind: input, shape index: {}]
  %s1 = inlined_call_operand.hbm [shape: bf16[32,256], index: 1, kind: input, shape index: {}]
  %s2 = inlined_call_operand.vmem [shape: f32[1,256], index: 2, kind: input, shape index: {}]
  %s3 = inlined_call_operand.hbm [shape: bf16[32,256], index: 3, kind: output, shape index: {}]
  %s4 = sld [smem:[#allocation0]]
  $region38: #{tpu_custom_call.1} parent=0
    _
  %s6 = ssub.s32 1, %s4
  %s7 = scalar_select 0, %s6, %s4
  $region1: #{tpu_custom_call.1} parent=0
    #allocation3 [shape = 'u8[16384]{0}', space=vmem, size = 0x4000, scoped, tag = 'input window, operand 0, single buffered']
    #allocation4 [shape = 's32[1]{0}', space=sflag, size = 0x4, scoped, tag = 'scoped memory for tpu_custom_call.1']
    #allocation5 [shape = 's32[1]{0}', space=sflag, size = 0x4, scoped, tag = 'scoped memory for tpu_custom_call.1']
    #allocation6 [shape = 'u8[16384]{0}', space=vmem, size = 0x4000, scoped, tag = 'input window, operand 1, single buffered']
    #allocation7 [shape = 's32[1]{0}', space=sflag, size = 0x4, scoped, tag = 'scoped memory for tpu_custom_call.1']
    #allocation8 [shape = 'u8[16384]{0}', space=vmem, size = 0x4000, scoped, tag = 'output window, operand 0, single buffered']
    %8 = vsyncpa [#allocation4], 0
    %9 = vsyncpa [#allocation7], 0
    %10 = vsyncpa [#allocation5], 0
    // Predicated region
    $region2: #{tpu_custom_call.1} parent=1 // pred_check
      _
    $region3: #{tpu_custom_call.1} parent=1 // pred_check_branch
      %12 = sbr.rel (0) target = $region5
    $region4: #{tpu_custom_call.1} parent=1 // pred_region
      %s14 = ssub.s32 512, 512
      %15 = vsyncadd [#allocation4], %s14
      %s16 = sshll.u32 [#allocation3], 4
      %s17 = int_to_ptr.vmem [resolvable:$true] %s16
      %22 = dma.hbm_to_vmem [thread:$0]  %s0, 512, %s17, [#allocation4], 128, 128, 8
    $region5: #{tpu_custom_call.1} parent=1 // pred_fallthru
      _
    // Predicated region
    $region6: #{tpu_custom_call.1} parent=1 // pred_check
      _
    $region7: #{tpu_custom_call.1} parent=1 // pred_check_branch
      %24 = sbr.rel (0) target = $region9
    $region8: #{tpu_custom_call.1} parent=1 // pred_region
      %s26 = ssub.s32 512, 512
      %27 = vsyncadd [#allocation7], %s26
      %s28 = sshll.u32 [#allocation6], 4
      %s29 = int_to_ptr.vmem [resolvable:$true] %s28
      %34 = dma.hbm_to_vmem [thread:$0]  %s1, 512, %s29, [#allocation7], 128, 128, 8
    $region9: #{tpu_custom_call.1} parent=1 // pred_fallthru
      _
    // Predicated region
    $region10: #{tpu_custom_call.1} parent=1 // pred_check
      _
    $region11: #{tpu_custom_call.1} parent=1 // pred_check_branch
      %36 = sbr.rel (0) target = $region13
    $region12: #{tpu_custom_call.1} parent=1 // pred_region
      _
    $region13: #{tpu_custom_call.1} parent=1 // pred_fallthru
      _
    // Predicated region
    $region14: #{tpu_custom_call.1} parent=1 // pred_check
      _
    $region15: #{tpu_custom_call.1} parent=1 // pred_check_branch
      %38 = sbr.rel (0) target = $region17
    $region16: #{tpu_custom_call.1} parent=1 // pred_region
      %39 = dma.done [#allocation4], 512
    $region17: #{tpu_custom_call.1} parent=1 // pred_fallthru
      _
    // Predicated region
    $region18: #{tpu_custom_call.1} parent=1 // pred_check
      _
    $region19: #{tpu_custom_call.1} parent=1 // pred_check_branch
      %41 = sbr.rel (0) target = $region21
    $region20: #{tpu_custom_call.1} parent=1 // pred_region
      %42 = dma.done [#allocation7], 512
    $region21: #{tpu_custom_call.1} parent=1 // pred_fallthru
      _
    %p44 = scmp.eq.s32.totalorder 0, 0
    // Predicated region
    $region22: #{tpu_custom_call.1} parent=1 // pred_check
      %p45 = pneg %p44
    $region23: #{tpu_custom_call.1} parent=1 // pred_check_branch
      %47 = sbr.rel (%p45) target = $region25
    $region24: #{tpu_custom_call.1} parent=1 // pred_region
      %48 = vst [vmem:[#allocation2] sm:$0xff] 0.0
      %49 = vst [vmem:[#allocation2 + $0x8] sm:$0xff] 0.0
      %50 = vst [vmem:[#allocation2 + $0x10] sm:$0xff] 0.0
      %51 = vst [vmem:[#allocation2 + $0x18] sm:$0xff] 0.0
      %52 = vst [vmem:[#allocation2 + $0x20] sm:$0xff] 0.0
      %53 = vst [vmem:[#allocation2 + $0x28] sm:$0xff] 0.0
      %54 = vst [vmem:[#allocation2 + $0x30] sm:$0xff] 0.0
      %55 = vst [vmem:[#allocation2 + $0x38] sm:$0xff] 0.0
    $region25: #{tpu_custom_call.1} parent=1 // pred_fallthru
      _
    %v56 = vld [vmem:[#allocation2] sm:$0xff]
    %v57 = vld [vmem:[#allocation2 + $0x8] sm:$0xff]
    %v58 = vld [vmem:[#allocation2 + $0x10] sm:$0xff]
    %v59 = vld [vmem:[#allocation2 + $0x18] sm:$0xff]
    %v60 = vld [vmem:[#allocation2 + $0x20] sm:$0xff]
    %v61 = vld [vmem:[#allocation2 + $0x28] sm:$0xff]
    %v62 = vld [vmem:[#allocation2 + $0x30] sm:$0xff]
    %v63 = vld [vmem:[#allocation2 + $0x38] sm:$0xff]
    %v64 = vld [vmem:[#allocation3] sm:$0xff]
    %v65 = vld [vmem:[#allocation3 + $0x8] sm:$0xff]
    %v66 = vld [vmem:[#allocation3 + $0x10] sm:$0xff]
    %v67 = vld [vmem:[#allocation3 + $0x18] sm:$0xff]
    %v68 = vpack.c.bf16 %v65, %v64
    %v69 = vpack.c.bf16 %v67, %v66
    %v70 = vld [vmem:[#allocation6] sm:$0xff]
    %v71 = vld [vmem:[#allocation6 + $0x8] sm:$0xff]
    %v72 = vld [vmem:[#allocation6 + $0x10] sm:$0xff]
    %v73 = vld [vmem:[#allocation6 + $0x18] sm:$0xff]
    %v78 = vunpack.c.l.b16 %v70
    %v79 = vunpack.c.h.b16 %v70
    %v80 = vunpack.c.l.b16 %v71
    %v81 = vunpack.c.h.b16 %v71
    %v82 = vunpack.c.l.b16 %v72
    %v83 = vunpack.c.h.b16 %v72
    %v84 = vunpack.c.l.b16 %v73
    %v85 = vunpack.c.h.b16 %v73
    %v86 = vpack.c.b16 %v80, %v78
    %v87 = vpack.c.b16 %v81, %v79
    %v88 = vpack.c.b16 %v84, %v82
    %v89 = vpack.c.b16 %v85, %v83
    %vm94 = vcmask 261120
    %v96 = vsel %vm94, %v68, 0
    %v99 = vsel %vm94, %v69, 0
    %101 = vmatprep.subr.bf16.mxu0 %v87
    %102 = vmatpush1.bf16.msra.mxu0 %v86
    %103 = vmatprep.subr.bf16.mxu0 %v89
    %104 = vmatpush1.bf16.msra.mxu0 %v88
    %105 = vmatprep.subr.bf16.mxu0 0
    %106 = vmatpush1.bf16.msra.mxu0 0
    %107 = vmatprep.subr.bf16.mxu0 0
    %108 = vmatpush1.bf16.msra.mxu0 0
    %109 = vmatprep.subr.bf16.mxu0 0
    %110 = vmatpush1.bf16.msra.mxu0 0
    %111 = vmatprep.subr.bf16.mxu0 0
    %112 = vmatpush1.bf16.msra.mxu0 0
    %113 = vmatprep.subr.bf16.mxu0 0
    %114 = vmatpush1.bf16.msra.mxu0 0
    %115 = vmatprep.subr.bf16.mxu0 0
    %116 = vmatpush1.bf16.msra.mxu0 0
    %117 = vmatprep.subr.bf16.mxu0 0
    %118 = vmatpush1.bf16.msra.mxu0 0
    %119 = vmatprep.subr.bf16.mxu0 0
    %120 = vmatpush1.bf16.msra.mxu0 0
    %121 = vmatprep.subr.bf16.mxu0 0
    %122 = vmatpush1.bf16.msra.mxu0 0
    %123 = vmatprep.subr.bf16.mxu0 0
    %124 = vmatpush1.bf16.msra.mxu0 0
    %125 = vmatprep.subr.bf16.mxu0 0
    %126 = vmatpush1.bf16.msra.mxu0 0
    %127 = vmatprep.subr.bf16.mxu0 0
    %128 = vmatpush1.bf16.msra.mxu0 0
    %129 = vmatprep.subr.bf16.mxu0 0
    %130 = vmatpush1.bf16.msra.mxu0 0
    %131 = vmatprep.subr.bf16.mxu0 0
    %132 = vmatpush1.bf16.msra.mxu0 0
    %133 = vmatprep.mubr.bf16.mxu0 0
    %134 = vmatmul.mubr.bf16.gmra.mrb[0].mxu0 %v96
    %v135 = vpop.f32.mrb[0].mxu0
    %v136 = vadd.f32 0.0, %v135
    %v137 = vpop.f32.mrb[0].mxu0
    %v138 = vadd.f32 0.0, %v137
    %v139 = vpop.f32.mrb[0].mxu0
    %v140 = vadd.f32 0.0, %v139
    %v141 = vpop.f32.mrb[0].mxu0
    %v142 = vadd.f32 0.0, %v141
    %143 = vmatprep.mubr.bf16.mxu0 0
    %144 = vmatmul.mubr.bf16.gmra.mrb[0].mxu0 %v99
    %v145 = vpop.f32.mrb[0].mxu0
    %v146 = vadd.f32 0.0, %v145
    %v147 = vpop.f32.mrb[0].mxu0
    %v148 = vadd.f32 0.0, %v147
    %v149 = vpop.f32.mrb[0].mxu0
    %v150 = vadd.f32 0.0, %v149
    %v151 = vpop.f32.mrb[0].mxu0
    %v152 = vadd.f32 0.0, %v151
    %153 = vdwg.mxu0
    %v154 = vadd.f32 %v56, %v136
    %v155 = vadd.f32 %v57, %v138
    %v156 = vadd.f32 %v58, %v140
    %v157 = vadd.f32 %v59, %v142
    %v158 = vadd.f32 %v60, %v146
    %v159 = vadd.f32 %v61, %v148
    %v160 = vadd.f32 %v62, %v150
    %v161 = vadd.f32 %v63, %v152
    %162 = vst [vmem:[#allocation2] sm:$0xff] %v154
    %163 = vst [vmem:[#allocation2 + $0x8] sm:$0xff] %v155
    %164 = vst [vmem:[#allocation2 + $0x10] sm:$0xff] %v156
    %165 = vst [vmem:[#allocation2 + $0x18] sm:$0xff] %v157
    %166 = vst [vmem:[#allocation2 + $0x20] sm:$0xff] %v158
    %167 = vst [vmem:[#allocation2 + $0x28] sm:$0xff] %v159
    %168 = vst [vmem:[#allocation2 + $0x30] sm:$0xff] %v160
    %169 = vst [vmem:[#allocation2 + $0x38] sm:$0xff] %v161
    // Predicated region
    $region26: #{tpu_custom_call.1} parent=1 // pred_check
      %p170 = pneg %p44
    $region27: #{tpu_custom_call.1} parent=1 // pred_check_branch
      %172 = sbr.rel (%p170) target = $region29
    $region28: #{tpu_custom_call.1} parent=1 // pred_region
      %v173 = vld [vmem:[#allocation2] sm:$0xff]
      %v174 = vld [vmem:[#allocation2 + $0x8] sm:$0xff]
      %v175 = vld [vmem:[#allocation2 + $0x10] sm:$0xff]
      %v176 = vld [vmem:[#allocation2 + $0x18] sm:$0xff]
      %v177 = vld [vmem:[#allocation2 + $0x20] sm:$0xff]
      %v178 = vld [vmem:[#allocation2 + $0x28] sm:$0xff]
      %v179 = vld [vmem:[#allocation2 + $0x30] sm:$0xff]
      %v180 = vld [vmem:[#allocation2 + $0x38] sm:$0xff]
      %v181 = vld [vmem:[%s2] sm:$0x3]
      %v183 = vlaneseq
      %v184 = vshrl.u32 %v183, 7
      %v185 = vsub.s32 0, %v184
      %v186 = vrot.slane %v181, %v185
      %v187 = vlaneseq
      %v188 = vshrl.u32 %v187, 7
      %v189 = vsub.s32 1, %v188
      %v190 = vrot.slane %v181, %v189
      %v193 = vadd.f32 %v173, %v186
      %v194 = vadd.f32 %v174, %v190
      %v195 = vadd.f32 %v175, %v186
      %v196 = vadd.f32 %v176, %v190
      %v197 = vadd.f32 %v177, %v186
      %v198 = vadd.f32 %v178, %v190
      %v199 = vadd.f32 %v179, %v186
      %v200 = vadd.f32 %v180, %v190
      %v201 = vpack.c.bf16 %v195, %v193
      %v202 = vpack.c.bf16 %v196, %v194
      %v203 = vpack.c.bf16 %v199, %v197
      %v204 = vpack.c.bf16 %v200, %v198
      %v209 = vunpack.c.l.b16 %v201
      %v210 = vunpack.c.l.b16 %v202
      %v211 = vunpack.c.h.b16 %v201
      %v212 = vunpack.c.h.b16 %v202
      %v213 = vunpack.c.l.b16 %v203
      %v214 = vunpack.c.l.b16 %v204
      %v215 = vunpack.c.h.b16 %v203
      %v216 = vunpack.c.h.b16 %v204
      %v217 = vpack.c.b16 %v210, %v209
      %v218 = vpack.c.b16 %v212, %v211
      %v219 = vpack.c.b16 %v214, %v213
      %v220 = vpack.c.b16 %v216, %v215
      %225 = vst [vmem:[#allocation8] sm:$0xff] %v217
      %226 = vst [vmem:[#allocation8 + $0x8] sm:$0xff] %v218
      %227 = vst [vmem:[#allocation8 + $0x10] sm:$0xff] %v219
      %228 = vst [vmem:[#allocation8 + $0x18] sm:$0xff] %v220
    $region29: #{tpu_custom_call.1} parent=1 // pred_fallthru
      _
    // Predicated region
    $region30: #{tpu_custom_call.1} parent=1 // pred_check
      _
    $region31: #{tpu_custom_call.1} parent=1 // pred_check_branch
      %230 = sbr.rel (0) target = $region33
    $region32: #{tpu_custom_call.1} parent=1 // pred_region
      %s232 = ssub.s32 512, 512
      %233 = vsyncadd [#allocation5], %s232
      %s234 = sshll.u32 [#allocation8], 4
      %s235 = int_to_ptr.vmem [resolvable:$true] %s234
      %240 = dma.vmem_to_hbm [thread:$0]  %s235, 512, %s3, [#allocation5], 128, 128, 8
    $region33: #{tpu_custom_call.1} parent=1 // pred_fallthru
      _
    // Predicated region
    $region34: #{tpu_custom_call.1} parent=1 // pred_check
      _
    $region35: #{tpu_custom_call.1} parent=1 // pred_check_branch
      %242 = sbr.rel (0) target = $region37
    $region36: #{tpu_custom_call.1} parent=1 // pred_region
      %243 = dma.done [#allocation5], 512
    $region37: #{tpu_custom_call.1} parent=1 // pred_fallthru
      _
    %244 = vsyncpa [#allocation4], 1
    %245 = vsyncpa [#allocation7], 1
    %246 = vsyncpa [#allocation5], 1

</llo_original>
